<compile_context>
chip_gen: v6e
topology: v6e:2x2x1
jax: 0.10.0
libtpu: 0.0.40
codegen_flags: <defaults>
</compile_context>

<pallas_src>
import functools

import jax
import jax.numpy as jnp
from jax.experimental import pallas as pl
from jax.experimental.pallas import tpu as pltpu


# Finite "minus infinity": large enough that exp() underflows to exactly 0 for
# any row with at least one unmasked position, and it avoids NaNs if a row is
# fully masked (reference would produce NaN there).
_MASK_VALUE = -1e30


def _attention_kernel(x_ref, w1_ref, b1_ref, w2_ref, b2_ref, mask_ref,
                      pooled_ref, a_ref, *, compute_dtype):
    BT, S, E = x_ref.shape
    x = x_ref[...]                                        # (BT, S, E) f32

    # ---- Linear(E, E) + Tanh  (Dropout p=0.0 -> identity) -----------------
    # One big (BT*S, E) @ (E, E) GEMM on the MXU (reshape is a pure view since
    # S is padded to a multiple of 8 and E stays on the lane axis).
    x2d = x.reshape(BT * S, E)
    h = jnp.dot(x2d.astype(compute_dtype), w1_ref[...].astype(compute_dtype),
                preferred_element_type=jnp.float32) + b1_ref[...]
    h = jnp.tanh(h).reshape(BT, S, E)                     # (BT, S, E) f32

    # ---- Linear(E, 1): VPU multiply + lane reduction -----------------------
    # Keeps the result in a lane-dense (BT, S) layout (sequence on lanes)
    # instead of an N=1 MXU matmul that produces a (S, 1) column.
    logits = jnp.sum(h * w2_ref[...], axis=-1) + b2_ref[0]     # (BT, S)

    # ---- masked_fill(~mask, -inf) ------------------------------------------
    logits = jnp.where(mask_ref[...] > 0.5, logits, _MASK_VALUE)

    # ---- softmax over the sequence (lane) axis ------------------------------
    mx = jnp.max(logits, axis=-1, keepdims=True)          # (BT, 1)
    e = jnp.exp(logits - mx)
    a = e / jnp.sum(e, axis=-1, keepdims=True)            # (BT, S)
    a_ref[...] = a                                        # lane-dense store

    # ---- pooled = sum_s a[b, s] * x[b, s, :] --------------------------------
    # Exact f32 multiply-reduce (lane-dense on E); matches the module's
    # elementwise sum(x * a, dim=1) bit-for-bit in f32.
    pooled_ref[...] = jnp.sum(x * a[:, :, None], axis=1)  # (BT, E)


def attention_forward(x, w1, b1, w2, b2, mask=None, *, block_b=None,
                      matmul_dtype=jnp.float32):
    """Pallas forward pass of the Attention module.

    x    : (B, S, E) float32
    w1   : (E, E)  first Linear weight, PyTorch (out, in) layout
    b1   : (E,)
    w2   : (1, E)  second Linear weight, PyTorch (out, in) layout
    b2   : (1,)
    mask : optional (B, S) bool, True = keep

    Returns (pooled (B, E), a (B, S, 1)), matching the PyTorch module.
    matmul_dtype=jnp.bfloat16 enables the bf16 MXU path (f32 accumulation).
    """
    B, S, E = x.shape
    x = x.astype(jnp.float32)

    # ---- pad sequence to a multiple of 8 (sublane tile), batch to a multiple
    #      of the batch tile, so every block is (8, 128)-friendly -------------
    S_p = -(-S // 8) * 8
    B8 = -(-B // 8) * 8
    if block_b is None:
        block_b = min(B8, 32)                     # up to 32 batch rows / step
    # Cap the per-step x tile at ~4 MiB so double-buffered tiles + weights fit
    # comfortably in scoped VMEM on all generations (v5e 16 MiB default scoped,
    # v6e 128 MiB physical, v7x 64 MiB physical).
    bytes_per_batch_row = S_p * E * 4
    max_bt = max(8, ((4 * 1024 * 1024) // bytes_per_batch_row) // 8 * 8)
    block_b = max(8, min(block_b, max_bt))
    B_p = -(-B // block_b) * block_b

    mask_f = (jnp.ones((B, S), jnp.float32) if mask is None
              else mask.astype(jnp.float32).reshape(B, S))

    # Zero-pad batch/sequence; padded positions carry mask=0 so they get
    # (finite) -1e30 logits -> exactly zero attention weight, and are sliced
    # off before returning.
    x_p = jnp.zeros((B_p, S_p, E), jnp.float32).at[:B, :S, :].set(x)
    mask_p = jnp.zeros((B_p, S_p), jnp.float32).at[:B, :S].set(mask_f)

    w1_t = w1.astype(jnp.float32).T.reshape(E, E)   # (in, out): kernel does x @ w1_t
    b1_r = b1.astype(jnp.float32).reshape(1, E)
    w2_r = w2.astype(jnp.float32).reshape(1, E)     # row vector for the VPU reduce
    b2_r = b2.astype(jnp.float32).reshape(1,)       # scalar, lives in SMEM

    kernel = functools.partial(_attention_kernel, compute_dtype=matmul_dtype)

    pooled, a = pl.pallas_call(
        kernel,
        out_shape=(
            jax.ShapeDtypeStruct((B_p, E), jnp.float32),
            jax.ShapeDtypeStruct((B_p, S_p), jnp.float32),
        ),
        grid_spec=pltpu.PrefetchScalarGridSpec(
            num_scalar_prefetch=0,
            grid=(B_p // block_b,),
            in_specs=[
                pl.BlockSpec((block_b, S_p, E), lambda i: (i, 0, 0)),  # x tile
                pl.BlockSpec((E, E), lambda i: (0, 0)),                # W1^T
                pl.BlockSpec((1, E), lambda i: (0, 0)),                # b1
                pl.BlockSpec((1, E), lambda i: (0, 0)),                # w2 row
                pl.BlockSpec(memory_space=pltpu.MemorySpace.SMEM),     # b2 scalar
                pl.BlockSpec((block_b, S_p), lambda i: (i, 0)),        # mask
            ],
            out_specs=[
                pl.BlockSpec((block_b, E), lambda i: (i, 0)),          # pooled
                pl.BlockSpec((block_b, S_p), lambda i: (i, 0)),        # a
            ],
        ),
        compiler_params=pltpu.CompilerParams(
            dimension_semantics=("parallel",),
            vmem_limit_bytes=32 * 1024 * 1024),
    )(x_p, w1_t, b1_r, w2_r, b2_r, mask_p)

    pooled = pooled[:B]
    a = a[:B, :S].reshape(B, S, 1)
    return pooled, a


def reference_forward(x, w1, b1, w2, b2, mask=None):
    """Pure-JAX reference with the exact math of the PyTorch module."""
    h = jnp.tanh(x @ w1.T + b1)                                   # Linear + Tanh
    logits = jnp.sum(h * w2[0], axis=-1, keepdims=True) + b2      # Linear(E, 1)
    if mask is not None:
        logits = jnp.where(mask[..., None], logits, -jnp.inf)
    a = jax.nn.softmax(logits, axis=1)
    pooled = jnp.sum(x * a, axis=1)
    return pooled, a


if __name__ == "__main__":
    B, S, E = 2, 8, 32
    key = jax.random.PRNGKey(0)
    kx, kw1, kb1, kw2, kb2 = jax.random.split(key, 5)

    x = jax.random.normal(kx, (B, S, E), jnp.float32)

    # PyTorch-style uniform(-1/sqrt(fan_in), 1/sqrt(fan_in)) init.
    bound = 1.0 / (E ** 0.5)
    w1 = jax.random.uniform(kw1, (E, E), jnp.float32, -bound, bound)  # (out, in)
    b1 = jax.random.uniform(kb1, (E,), jnp.float32, -bound, bound)
    w2 = jax.random.uniform(kw2, (1, E), jnp.float32, -bound, bound)  # (out, in)
    b2 = jax.random.uniform(kb2, (1,), jnp.float32, -bound, bound)

    # Mask: batch 0 keeps the first 6 positions, batch 1 keeps all.
    mask = jnp.array([[1, 1, 1, 1, 1, 1, 0, 0],
                      [1, 1, 1, 1, 1, 1, 1, 1]], dtype=bool)

    # --- f32 path (exact module semantics) -----------------------------------
    pooled, a = attention_forward(x, w1, b1, w2, b2, mask)
    jax.block_until_ready((pooled, a))

    ref_pooled, ref_a = reference_forward(x, w1, b1, w2, b2, mask)
    assert pooled.shape == (B, E) and a.shape == (B, S, 1)
    assert jnp.allclose(pooled, ref_pooled, atol=1e-5, rtol=1e-5)
    assert jnp.allclose(a, ref_a, atol=1e-5, rtol=1e-5)

    # --- no-mask path ---------------------------------------------------------
    pooled_nm, a_nm = attention_forward(x, w1, b1, w2, b2, None)
    jax.block_until_ready((pooled_nm, a_nm))
    ref_pooled_nm, ref_a_nm = reference_forward(x, w1, b1, w2, b2, None)
    assert jnp.allclose(pooled_nm, ref_pooled_nm, atol=1e-5, rtol=1e-5)
    assert jnp.allclose(a_nm, ref_a_nm, atol=1e-5, rtol=1e-5)

    # --- bf16 MXU path (performance option; f32 accumulation) ----------------
    pooled_bf, a_bf = attention_forward(x, w1, b1, w2, b2, mask,
                                        matmul_dtype=jnp.bfloat16)
    jax.block_until_ready((pooled_bf, a_bf))
    assert jnp.allclose(pooled_bf, ref_pooled, atol=5e-2, rtol=5e-2)
    assert jnp.allclose(a_bf, ref_a, atol=5e-2, rtol=5e-2)

    print("KERNEL_OK")
</pallas_src>

<mosaic_0001>
module attributes {stable_mosaic.version = 11 : i64} {
  func.func @_attention_kernel(%arg0: i32, %arg1: memref<8x8x32xf32, #tpu.memory_space<vmem>>, %arg2: memref<32x32xf32, #tpu.memory_space<vmem>>, %arg3: memref<1x32xf32, #tpu.memory_space<vmem>>, %arg4: memref<1x32xf32, #tpu.memory_space<vmem>>, %arg5: memref<1xf32, #tpu.memory_space<smem>>, %arg6: memref<8x8xf32, #tpu.memory_space<vmem>>, %arg7: memref<8x32xf32, #tpu.memory_space<vmem>>, %arg8: memref<8x8xf32, #tpu.memory_space<vmem>>) attributes {dimension_semantics = [#tpu.dimension_semantics<parallel>], iteration_bounds = array<i64: 1>, scalar_prefetch = 0 : i64, scratch_operands = 0 : i64, tpu.core_type = #tpu.core_type<tc>, window_params = [{transform_indices = @transform_0, window_bounds = array<i64: 8, 8, 32>}, {pipeline_mode = #tpu.pipeline_mode<synchronous>, transform_indices = @transform_1, window_bounds = array<i64: 32, 32>}, {pipeline_mode = #tpu.pipeline_mode<synchronous>, transform_indices = @transform_2, window_bounds = array<i64: 1, 32>}, {pipeline_mode = #tpu.pipeline_mode<synchronous>, transform_indices = @transform_3, window_bounds = array<i64: 1, 32>}, {transform_indices = @transform_4, window_bounds = array<i64: 1>}, {transform_indices = @transform_5, window_bounds = array<i64: 8, 8>}, {transform_indices = @transform_6, window_bounds = array<i64: 8, 32>}, {transform_indices = @transform_7, window_bounds = array<i64: 8, 8>}]} {
    %c0 = arith.constant 0 : index
    %c0_0 = arith.constant 0 : index
    %c0_1 = arith.constant 0 : index
    %0 = vector.load %arg1[%c0, %c0_0, %c0_1] : memref<8x8x32xf32, #tpu.memory_space<vmem>>, vector<8x8x32xf32>
    %1 = vector.shape_cast %0 : vector<8x8x32xf32> to vector<64x32xf32>
    %c0_2 = arith.constant 0 : index
    %c0_3 = arith.constant 0 : index
    %2 = vector.load %arg2[%c0_2, %c0_3] : memref<32x32xf32, #tpu.memory_space<vmem>>, vector<32x32xf32>
    %cst = arith.constant dense<0.000000e+00> : vector<64x32xf32>
    %3 = tpu.matmul %1, %2, %cst {dimension_numbers = #tpu.dot_dimension_numbers<[1], [0], [0], [1], [0, 0, 1, 1], [], []>} : vector<64x32xf32>, vector<32x32xf32>, vector<64x32xf32> -> vector<64x32xf32>
    %c0_4 = arith.constant 0 : index
    %c0_5 = arith.constant 0 : index
    %4 = vector.load %arg3[%c0_4, %c0_5] : memref<1x32xf32, #tpu.memory_space<vmem>>, vector<1x32xf32>
    %5 = vector.broadcast %4 : vector<1x32xf32> to vector<64x32xf32>
    %6 = arith.addf %3, %5 : vector<64x32xf32>
    %7 = math.tanh %6 : vector<64x32xf32>
    %8 = vector.shape_cast %7 : vector<64x32xf32> to vector<8x8x32xf32>
    %c0_6 = arith.constant 0 : index
    %c0_7 = arith.constant 0 : index
    %9 = vector.load %arg4[%c0_6, %c0_7] : memref<1x32xf32, #tpu.memory_space<vmem>>, vector<1x32xf32>
    %10 = vector.shape_cast %9 : vector<1x32xf32> to vector<1x1x32xf32>
    %11 = vector.broadcast %10 : vector<1x1x32xf32> to vector<8x8x32xf32>
    %12 = arith.mulf %8, %11 : vector<8x8x32xf32>
    %cst_8 = arith.constant dense<0.000000e+00> : vector<8x8xf32>
    %13 = vector.multi_reduction <add>, %12, %cst_8 [2] : vector<8x8x32xf32> to vector<8x8xf32>
    %c0_9 = arith.constant 0 : index
    %14 = memref.load %arg5[%c0_9] : memref<1xf32, #tpu.memory_space<smem>>
    %15 = vector.broadcast %14 : f32 to vector<8x8xf32>
    %16 = arith.addf %13, %15 : vector<8x8xf32>
    %c0_10 = arith.constant 0 : index
    %c0_11 = arith.constant 0 : index
    %17 = vector.load %arg6[%c0_10, %c0_11] : memref<8x8xf32, #tpu.memory_space<vmem>>, vector<8x8xf32>
    %cst_12 = arith.constant 5.000000e-01 : f32
    %18 = vector.broadcast %cst_12 : f32 to vector<8x8xf32>
    %19 = arith.cmpf ogt, %17, %18 : vector<8x8xf32>
    %cst_13 = arith.constant -1.000000e+30 : f32
    %20 = vector.broadcast %cst_13 : f32 to vector<8x8xf32>
    %21 = arith.select %19, %16, %20 : vector<8x8xi1>, vector<8x8xf32>
    %cst_14 = arith.constant dense<0xFF800000> : vector<8xf32>
    %22 = vector.multi_reduction <maximumf>, %21, %cst_14 [1] : vector<8x8xf32> to vector<8xf32>
    %23 = vector.shape_cast %22 : vector<8xf32> to vector<8x1xf32>
    %24 = vector.broadcast %23 : vector<8x1xf32> to vector<8x8xf32>
    %25 = arith.subf %21, %24 : vector<8x8xf32>
    %26 = math.exp %25 : vector<8x8xf32>
    %cst_15 = arith.constant dense<0.000000e+00> : vector<8xf32>
    %27 = vector.multi_reduction <add>, %26, %cst_15 [1] : vector<8x8xf32> to vector<8xf32>
    %28 = vector.shape_cast %27 : vector<8xf32> to vector<8x1xf32>
    %29 = vector.broadcast %28 : vector<8x1xf32> to vector<8x8xf32>
    %30 = arith.divf %26, %29 : vector<8x8xf32>
    %c0_16 = arith.constant 0 : index
    %c0_17 = arith.constant 0 : index
    %31 = vector.load %arg8[%c0_16, %c0_17] : memref<8x8xf32, #tpu.memory_space<vmem>>, vector<8x8xf32>
    tpu.vector_store %arg8[%c0_16, %c0_17], %30 {strides = array<i32>} : memref<8x8xf32, #tpu.memory_space<vmem>>, vector<8x8xf32>,
    %32 = vector.shape_cast %30 : vector<8x8xf32> to vector<8x8x1xf32>
    %33 = vector.broadcast %32 : vector<8x8x1xf32> to vector<8x8x32xf32>
    %34 = arith.mulf %0, %33 : vector<8x8x32xf32>
    %cst_18 = arith.constant dense<0.000000e+00> : vector<8x32xf32>
    %35 = vector.multi_reduction <add>, %34, %cst_18 [1] : vector<8x8x32xf32> to vector<8x32xf32>
    %c0_19 = arith.constant 0 : index
    %c0_20 = arith.constant 0 : index
    %36 = vector.load %arg7[%c0_19, %c0_20] : memref<8x32xf32, #tpu.memory_space<vmem>>, vector<8x32xf32>
    tpu.vector_store %arg7[%c0_19, %c0_20], %35 {strides = array<i32>} : memref<8x32xf32, #tpu.memory_space<vmem>>, vector<8x32xf32>,
    return
  }
  func.func @transform_0(%arg0: i32) -> (i32, i32, i32) {
    %c0_i32 = arith.constant 0 : i32
    %c0_i32_0 = arith.constant 0 : i32
    %c0_i32_1 = arith.constant 0 : i32
    return %arg0, %c0_i32, %c0_i32_0 : i32, i32, i32
  }
  func.func @transform_1(%arg0: i32) -> (i32, i32) {
    %c0_i32 = arith.constant 0 : i32
    %c0_i32_0 = arith.constant 0 : i32
    %c0_i32_1 = arith.constant 0 : i32
    return %c0_i32, %c0_i32_0 : i32, i32
  }
  func.func @transform_2(%arg0: i32) -> (i32, i32) {
    %c0_i32 = arith.constant 0 : i32
    %c0_i32_0 = arith.constant 0 : i32
    %c0_i32_1 = arith.constant 0 : i32
    return %c0_i32, %c0_i32_0 : i32, i32
  }
  func.func @transform_3(%arg0: i32) -> (i32, i32) {
    %c0_i32 = arith.constant 0 : i32
    %c0_i32_0 = arith.constant 0 : i32
    %c0_i32_1 = arith.constant 0 : i32
    return %c0_i32, %c0_i32_0 : i32, i32
  }
  func.func @transform_4(%arg0: i32) -> i32 {
    %c0_i32 = arith.constant 0 : i32
    %c0_i32_0 = arith.constant 0 : i32
    return %c0_i32 : i32
  }
  func.func @transform_5(%arg0: i32) -> (i32, i32) {
    %c0_i32 = arith.constant 0 : i32
    %c0_i32_0 = arith.constant 0 : i32
    return %arg0, %c0_i32 : i32, i32
  }
  func.func @transform_6(%arg0: i32) -> (i32, i32) {
    %c0_i32 = arith.constant 0 : i32
    %c0_i32_0 = arith.constant 0 : i32
    return %arg0, %c0_i32 : i32, i32
  }
  func.func @transform_7(%arg0: i32) -> (i32, i32) {
    %c0_i32 = arith.constant 0 : i32
    %c0_i32_0 = arith.constant 0 : i32
    return %arg0, %c0_i32 : i32, i32
  }
}

</mosaic_0001>

<llo_original>
// kernel: tpu_custom_call.1
$region0: #{tpu_custom_call.1}
  #allocation0 [shape = 'u32[]', space=smem, size = 0x4, offset = 0x4, fixed_abs, tag = 'smem constant byte address 0x4 - core index']
  #allocation1 [shape = 'u32[144,128]{1,0:T(1,128)}', space=vmem, size = 0x12000, scoped, tag = 'internal scratch']
  #allocation2 [shape = 'f32[1]{0:T(128)S(6)}', space=smem, size = 0x200, scoped, tag = 'scoped memory for tpu_custom_call.1']
  %s0 = inlined_call_operand.hbm [shape: f32[8,8,32], index: 0, kind: input, shape index: {}]
  %s1 = inlined_call_operand.hbm [shape: f32[32,32], index: 1, kind: input, shape index: {}]
  %s2 = inlined_call_operand.vmem [shape: f32[1,32], index: 2, kind: input, shape index: {}]
  %s3 = inlined_call_operand.hbm [shape: f32[1,32], index: 3, kind: input, shape index: {}]
  %s4 = inlined_call_operand.<no memory space> [shape: f32[1], index: 4, kind: input, shape index: {}]
  %s5 = inlined_call_operand.vmem [shape: f32[8,8], index: 5, kind: input, shape index: {}]
  %s6 = inlined_call_operand.hbm [shape: f32[8,32], index: 6, kind: output, shape index: {0}]
  %s7 = inlined_call_operand.hbm [shape: f32[8,8], index: 7, kind: output, shape index: {1}]
  %8 = xla_tuple %s6, %s7
  %s9 = sld [smem:[#allocation0]]
  $region54: #{tpu_custom_call.1} parent=0
    _
  %s11 = ssub.s32 1, %s9
  %s12 = scalar_select 0, %s11, %s9
  %13 = sst [smem:[#allocation2]] %s4
  $region1: #{tpu_custom_call.1} parent=0
    #allocation3 [shape = 'u8[32768]{0}', space=vmem, size = 0x8000, scoped, tag = 'input window, operand 0, single buffered']
    #allocation4 [shape = 's32[1]{0}', space=sflag, size = 0x4, scoped, tag = 'scoped memory for tpu_custom_call.1']
    #allocation5 [shape = 's32[1]{0}', space=sflag, size = 0x4, scoped, tag = 'scoped memory for tpu_custom_call.1']
    #allocation6 [shape = 'u8[16384]{0}', space=vmem, size = 0x4000, scoped, tag = 'input window, operand 1, single buffered']
    #allocation7 [shape = 's32[1]{0}', space=sflag, size = 0x4, scoped, tag = 'scoped memory for tpu_custom_call.1']
    #allocation8 [shape = 'u8[512]{0}', space=vmem, size = 0x400, scoped, tag = 'input window, operand 3, single buffered']
    #allocation9 [shape = 'u8[4096]{0}', space=vmem, size = 0x1000, scoped, tag = 'output window, operand 0, single buffered']
    #allocation10 [shape = 'u8[4096]{0}', space=vmem, size = 0x1000, scoped, tag = 'output window, operand 1, single buffered']
    #allocation11 [shape = 's32[1]{0}', space=sflag, size = 0x4, scoped, tag = 'scoped memory for tpu_custom_call.1']
    %14 = vsyncpa [#allocation4], 0
    %15 = vsyncpa [#allocation7], 0
    %16 = vsyncpa [#allocation5], 0
    %17 = vsyncpa [#allocation11], 0
    // Predicated region
    $region2: #{tpu_custom_call.1} parent=1 // pred_check
      _
    $region3: #{tpu_custom_call.1} parent=1 // pred_check_branch
      %19 = sbr.rel (0) target = $region5
    $region4: #{tpu_custom_call.1} parent=1 // pred_region
      %s21 = ssub.s32 1024, 1024
      %22 = vsyncadd [#allocation4], %s21
      %s23 = sshll.u32 [#allocation3], 4
      %s24 = int_to_ptr.vmem [resolvable:$true] %s23
      %29 = dma.hbm_to_vmem [thread:$0]  %s0, 1024, %s24, [#allocation4], 128, 128, 8
    $region5: #{tpu_custom_call.1} parent=1 // pred_fallthru
      _
    // Predicated region
    $region6: #{tpu_custom_call.1} parent=1 // pred_check
      _
    $region7: #{tpu_custom_call.1} parent=1 // pred_check_branch
      %31 = sbr.rel (0) target = $region9
    $region8: #{tpu_custom_call.1} parent=1 // pred_region
      %s33 = ssub.s32 512, 512
      %34 = vsyncadd [#allocation7], %s33
      %s35 = sshll.u32 [#allocation6], 4
      %s36 = int_to_ptr.vmem [resolvable:$true] %s35
      %41 = dma.hbm_to_vmem [thread:$0]  %s1, 512, %s36, [#allocation7], 128, 128, 8
    $region9: #{tpu_custom_call.1} parent=1 // pred_fallthru
      _
    // Predicated region
    $region10: #{tpu_custom_call.1} parent=1 // pred_check
      _
    $region11: #{tpu_custom_call.1} parent=1 // pred_check_branch
      %43 = sbr.rel (0) target = $region13
    $region12: #{tpu_custom_call.1} parent=1 // pred_region
      _
    $region13: #{tpu_custom_call.1} parent=1 // pred_fallthru
      _
    // Predicated region
    $region14: #{tpu_custom_call.1} parent=1 // pred_check
      _
    $region15: #{tpu_custom_call.1} parent=1 // pred_check_branch
      %45 = sbr.rel (0) target = $region17
    $region16: #{tpu_custom_call.1} parent=1 // pred_region
      %s47 = ssub.s32 16, 16
      %48 = vsyncadd [#allocation7], %s47
      %s50 = sshll.u32 [#allocation8], 4
      %s51 = int_to_ptr.vmem [resolvable:$true] %s50
      %53 = dma.hbm_to_vmem [thread:$0]  %s3, 16, %s51, [#allocation7]
    $region17: #{tpu_custom_call.1} parent=1 // pred_fallthru
      _
    // Predicated region
    $region18: #{tpu_custom_call.1} parent=1 // pred_check
      _
    $region19: #{tpu_custom_call.1} parent=1 // pred_check_branch
      %55 = sbr.rel (0) target = $region21
    $region20: #{tpu_custom_call.1} parent=1 // pred_region
      _
    $region21: #{tpu_custom_call.1} parent=1 // pred_fallthru
      _
    // Predicated region
    $region22: #{tpu_custom_call.1} parent=1 // pred_check
      _
    $region23: #{tpu_custom_call.1} parent=1 // pred_check_branch
      %57 = sbr.rel (0) target = $region25
    $region24: #{tpu_custom_call.1} parent=1 // pred_region
      _
    $region25: #{tpu_custom_call.1} parent=1 // pred_fallthru
      _
    // Predicated region
    $region26: #{tpu_custom_call.1} parent=1 // pred_check
      _
    $region27: #{tpu_custom_call.1} parent=1 // pred_check_branch
      %59 = sbr.rel (0) target = $region29
    $region28: #{tpu_custom_call.1} parent=1 // pred_region
      %60 = dma.done [#allocation4], 1024
    $region29: #{tpu_custom_call.1} parent=1 // pred_fallthru
      _
    // Predicated region
    $region30: #{tpu_custom_call.1} parent=1 // pred_check
      _
    $region31: #{tpu_custom_call.1} parent=1 // pred_check_branch
      %62 = sbr.rel (0) target = $region33
    $region32: #{tpu_custom_call.1} parent=1 // pred_region
      %63 = dma.done [#allocation7], 512
    $region33: #{tpu_custom_call.1} parent=1 // pred_fallthru
      _
    // Predicated region
    $region34: #{tpu_custom_call.1} parent=1 // pred_check
      _
    $region35: #{tpu_custom_call.1} parent=1 // pred_check_branch
      %65 = sbr.rel (0) target = $region37
    $region36: #{tpu_custom_call.1} parent=1 // pred_region
      %66 = dma.done [#allocation7], 16
    $region37: #{tpu_custom_call.1} parent=1 // pred_fallthru
      _
    %v67 = vld [vmem:[#allocation3] sm:$0xff]
    %v68 = vld [vmem:[#allocation3 + $0x8] sm:$0xff]
    %v69 = vld [vmem:[#allocation3 + $0x10] sm:$0xff]
    %v70 = vld [vmem:[#allocation3 + $0x18] sm:$0xff]
    %v71 = vld [vmem:[#allocation3 + $0x20] sm:$0xff]
    %v72 = vld [vmem:[#allocation3 + $0x28] sm:$0xff]
    %v73 = vld [vmem:[#allocation3 + $0x30] sm:$0xff]
    %v74 = vld [vmem:[#allocation3 + $0x38] sm:$0xff]
    %v75 = vld [vmem:[#allocation6] sm:$0xff]
    %v76 = vld [vmem:[#allocation6 + $0x8] sm:$0xff]
    %v77 = vld [vmem:[#allocation6 + $0x10] sm:$0xff]
    %v78 = vld [vmem:[#allocation6 + $0x18] sm:$0xff]
    %v79 = vld [vmem:[%s2] sm:$0x1]
    %v81 = vlaneseq
    %v82 = vshrl.u32 %v81, 7
    %v83 = vsub.s32 0, %v82
    %v84 = vrot.slane %v79, %v83
    %vm86 = vcmask 261120
    %v88 = vsel %vm86, %v67, 0
    %v91 = vsel %vm86, %v68, 0
    %v94 = vsel %vm86, %v69, 0
    %v97 = vsel %vm86, %v70, 0
    %v100 = vsel %vm86, %v71, 0
    %v103 = vsel %vm86, %v72, 0
    %v106 = vsel %vm86, %v73, 0
    %v109 = vsel %vm86, %v74, 0
    %111 = vmatprep.subr.mxu0 0.0
    %112 = vmatpush1.msra.mxu0 0.0
    %113 = vmatprep.subr.mxu0 0.0
    %114 = vmatpush1.msra.mxu0 0.0
    %115 = vmatprep.subr.mxu0 0.0
    %116 = vmatpush1.msra.mxu0 0.0
    %117 = vmatprep.subr.mxu0 0.0
    %118 = vmatpush1.msra.mxu0 0.0
    %119 = vmatprep.subr.mxu0 0.0
    %120 = vmatpush1.msra.mxu0 0.0
    %121 = vmatprep.subr.mxu0 0.0
    %122 = vmatpush1.msra.mxu0 0.0
    %123 = vmatprep.subr.mxu0 0.0
    %124 = vmatpush1.msra.mxu0 0.0
    %125 = vmatprep.subr.mxu0 0.0
    %126 = vmatpush1.msra.mxu0 0.0
    %127 = vmatprep.subr.mxu0 0.0
    %128 = vmatpush1.msra.mxu0 0.0
    %129 = vmatprep.subr.mxu0 0.0
    %130 = vmatpush1.msra.mxu0 0.0
    %131 = vmatprep.subr.mxu0 0.0
    %132 = vmatpush1.msra.mxu0 0.0
    %133 = vmatprep.subr.mxu0 0.0
    %134 = vmatpush1.msra.mxu0 0.0
    %135 = vmatprep.subr.mxu0 0.0
    %136 = vmatpush1.msra.mxu0 %v78
    %137 = vmatprep.subr.mxu0 0.0
    %138 = vmatpush1.msra.mxu0 %v77
    %139 = vmatprep.subr.mxu0 0.0
    %140 = vmatpush1.msra.mxu0 %v76
    %141 = vmatprep.subr.mxu0 0.0
    %142 = vmatpush1.msra.mxu0 %v75
    %143 = vmatprep.subr.mxu0 0.0
    %144 = vmatpush2.msra.mxu0 0.0
    %145 = vmatprep.subr.mxu0 0.0
    %146 = vmatpush2.msra.mxu0 0.0
    %147 = vmatprep.subr.mxu0 0.0
    %148 = vmatpush2.msra.mxu0 0.0
    %149 = vmatprep.subr.mxu0 0.0
    %150 = vmatpush2.msra.mxu0 0.0
    %151 = vmatprep.subr.mxu0 0.0
    %152 = vmatpush2.msra.mxu0 0.0
    %153 = vmatprep.subr.mxu0 0.0
    %154 = vmatpush2.msra.mxu0 0.0
    %155 = vmatprep.subr.mxu0 0.0
    %156 = vmatpush2.msra.mxu0 0.0
    %157 = vmatprep.subr.mxu0 0.0
    %158 = vmatpush2.msra.mxu0 0.0
    %159 = vmatprep.subr.mxu0 0.0
    %160 = vmatpush2.msra.mxu0 0.0
    %161 = vmatprep.subr.mxu0 0.0
    %162 = vmatpush2.msra.mxu0 0.0
    %163 = vmatprep.subr.mxu0 0.0
    %164 = vmatpush2.msra.mxu0 0.0
    %165 = vmatprep.subr.mxu0 0.0
    %166 = vmatpush2.msra.mxu0 0.0
    %167 = vmatprep.subr.mxu0 0.0
    %168 = vmatpush2.msra.mxu0 0.0
    %169 = vmatprep.subr.mxu0 0.0
    %170 = vmatpush2.msra.mxu0 0.0
    %171 = vmatprep.subr.mxu0 0.0
    %172 = vmatpush2.msra.mxu0 0.0
    %173 = vmatprep.subr.mxu0 0.0
    %174 = vmatpush2.msra.mxu0 0.0
    %175 = vmatprep.mubr.f32.mxu0 0.0
    %176 = vmatmul.mubr.f32.gmra.mxu0 %v88
    %v177 = vpop.f32.mrf.mxu0
    %v178 = vadd.f32 %v84, %v177
    %v179 = vpop.f32.mrf.mxu0
    %180 = vmatprep.mubr.f32.mxu0 0.0
    %181 = vmatmul.mubr.f32.gmra.mxu0 %v91
    %v182 = vpop.f32.mrf.mxu0
    %v183 = vadd.f32 %v84, %v182
    %v184 = vpop.f32.mrf.mxu0
    %185 = vmatprep.mubr.f32.mxu0 0.0
    %186 = vmatmul.mubr.f32.gmra.mxu0 %v94
    %v187 = vpop.f32.mrf.mxu0
    %v188 = vadd.f32 %v84, %v187
    %v189 = vpop.f32.mrf.mxu0
    %190 = vmatprep.mubr.f32.mxu0 0.0
    %191 = vmatmul.mubr.f32.gmra.mxu0 %v97
    %v192 = vpop.f32.mrf.mxu0
    %v193 = vadd.f32 %v84, %v192
    %v194 = vpop.f32.mrf.mxu0
    %195 = vmatprep.mubr.f32.mxu0 0.0
    %196 = vmatmul.mubr.f32.gmra.mxu0 %v100
    %v197 = vpop.f32.mrf.mxu0
    %v198 = vadd.f32 %v84, %v197
    %v199 = vpop.f32.mrf.mxu0
    %200 = vmatprep.mubr.f32.mxu0 0.0
    %201 = vmatmul.mubr.f32.gmra.mxu0 %v103
    %v202 = vpop.f32.mrf.mxu0
    %v203 = vadd.f32 %v84, %v202
    %v204 = vpop.f32.mrf.mxu0
    %205 = vmatprep.mubr.f32.mxu0 0.0
    %206 = vmatmul.mubr.f32.gmra.mxu0 %v106
    %v207 = vpop.f32.mrf.mxu0
    %v208 = vadd.f32 %v84, %v207
    %v209 = vpop.f32.mrf.mxu0
    %210 = vmatprep.mubr.f32.mxu0 0.0
    %211 = vmatmul.mubr.f32.gmra.mxu0 %v109
    %v212 = vpop.f32.mrf.mxu0
    %v213 = vadd.f32 %v84, %v212
    %v214 = vpop.f32.mrf.mxu0
    %215 = vdwg.mxu0
    %v216 = vtanh.pop %v178
    %v217 = vtanh.pop %v183
    %v218 = vtanh.pop %v188
    %v219 = vtanh.pop %v193
    %v220 = vtanh.pop %v198
    %v221 = vtanh.pop %v203
    %v222 = vtanh.pop %v208
    %v223 = vtanh.pop %v213
    %v224 = vld [vmem:[#allocation8] sm:$0x1]
    %v226 = vlaneseq
    %v227 = vshrl.u32 %v226, 7
    %v228 = vsub.s32 0, %v227
    %v229 = vrot.slane %v224, %v228
    %v231 = vmul.f32 %v216, %v229
    %v232 = vmul.f32 %v217, %v229
    %v233 = vmul.f32 %v218, %v229
    %v234 = vmul.f32 %v219, %v229
    %v235 = vmul.f32 %v220, %v229
    %v236 = vmul.f32 %v221, %v229
    %v237 = vmul.f32 %v222, %v229
    %v238 = vmul.f32 %v223, %v229
    %v239 = vsel %vm86, %v231, 0.0
    %240 = vadd.xlane.f32.xlu0 %v239
    %v241 = vpop.xlane.xlu0 %240
    %v242 = vsel %vm86, %v232, 0.0
    %243 = vadd.xlane.f32.xlu0 %v242
    %v244 = vpop.xlane.xlu0 %243
    %v245 = vsel %vm86, %v233, 0.0
    %246 = vadd.xlane.f32.xlu0 %v245
    %v247 = vpop.xlane.xlu0 %246
    %v248 = vsel %vm86, %v234, 0.0
    %249 = vadd.xlane.f32.xlu0 %v248
    %v250 = vpop.xlane.xlu0 %249
    %v251 = vsel %vm86, %v235, 0.0
    %252 = vadd.xlane.f32.xlu0 %v251
    %v253 = vpop.xlane.xlu0 %252
    %v254 = vsel %vm86, %v236, 0.0
    %255 = vadd.xlane.f32.xlu0 %v254
    %v256 = vpop.xlane.xlu0 %255
    %v257 = vsel %vm86, %v237, 0.0
    %258 = vadd.xlane.f32.xlu0 %v257
    %v259 = vpop.xlane.xlu0 %258
    %v260 = vsel %vm86, %v238, 0.0
    %261 = vadd.xlane.f32.xlu0 %v260
    %v262 = vpop.xlane.xlu0 %261
    %s263 = sld [smem:[#allocation2]]
    %v264 = vstv %s263
    %v265 = vadd.f32 %v241, %v264
    %v266 = vadd.f32 %v244, %v264
    %v267 = vadd.f32 %v247, %v264
    %v268 = vadd.f32 %v250, %v264
    %v269 = vadd.f32 %v253, %v264
    %v270 = vadd.f32 %v256, %v264
    %v271 = vadd.f32 %v259, %v264
    %v272 = vadd.f32 %v262, %v264
    %v273 = vld [vmem:[%s5] sm:$0xff]
    %vm274 = vcmp.gt.f32.partialorder %v273, 0.5
    %v283 = vlaneseq
    %v284 = vand.u32 %v283, 127
    %v285 = vlaneseq
    %v286 = vshrl.u32 %v285, 7
    %v287 = vsub.s32 %v284, %v286
    %v288 = vrot.slane %v265, %v287
    %v289 = vlaneseq
    %v290 = vshrl.u32 %v289, 7
    %v291 = vsub.s32 %v284, %v290
    %v292 = vrot.slane %v266, %v291
    %v293 = vlaneseq
    %v294 = vshrl.u32 %v293, 7
    %v295 = vsub.s32 %v284, %v294
    %v296 = vrot.slane %v267, %v295
    %v297 = vlaneseq
    %v298 = vshrl.u32 %v297, 7
    %v299 = vsub.s32 %v284, %v298
    %v300 = vrot.slane %v268, %v299
    %v301 = vlaneseq
    %v302 = vshrl.u32 %v301, 7
    %v303 = vsub.s32 %v284, %v302
    %v304 = vrot.slane %v269, %v303
    %v305 = vlaneseq
    %v306 = vshrl.u32 %v305, 7
    %v307 = vsub.s32 %v284, %v306
    %v308 = vrot.slane %v270, %v307
    %v309 = vlaneseq
    %v310 = vshrl.u32 %v309, 7
    %v311 = vsub.s32 %v284, %v310
    %v312 = vrot.slane %v271, %v311
    %v313 = vlaneseq
    %v314 = vshrl.u32 %v313, 7
    %v315 = vsub.s32 %v284, %v314
    %v316 = vrot.slane %v272, %v315
    %vm317 = vcmask 1041409
    %v318 = vsel %vm317, %v292, %v288
    %vm319 = vcmask 1042434
    %v320 = vsel %vm319, %v296, %v318
    %vm321 = vcmask 1043459
    %v322 = vsel %vm321, %v300, %v320
    %vm323 = vcmask 1044484
    %v324 = vsel %vm323, %v304, %v322
    %vm325 = vcmask 1045509
    %v326 = vsel %vm325, %v308, %v324
    %vm327 = vcmask 1046534
    %v328 = vsel %vm327, %v312, %v326
    %vm329 = vcmask 1047559
    %v330 = vsel %vm329, %v316, %v328
    %v332 = vsel %vm274, %v330, -1e+30
    %vm333 = vcmask 64512
    %v334 = vsel %vm333, %v332, -inf
    %335 = vmax.xlane.f32.xlu0 %v334
    %v336 = vpop.xlane.xlu0 %335
    %v337 = vsub.f32 %v332, %v336
    %v338 = vmul.f32 %v337, 1.442695
    %v339 = vpow.pop %v338
    %v340 = vsel %vm333, %v339, 0.0
    %341 = vadd.xlane.f32.xlu0 %v340
    %v342 = vpop.xlane.xlu0 %341
    %v343 = vrcp.pop %v342
    %v344 = vmul.f32 %v339, %v343
    %345 = vst.msk [vmem:[#allocation10] sm:$0xff] %vm333, %v344
    %v346 = vlaneseq
    %v347 = vshrl.u32 %v346, 7
    %v348 = vsub.s32 0, %v347
    %v349 = vrot.slane %v344, %v348
    %351 = vbcast.lane.b32.xlu0 %v349, 256
    %v352 = vpop.permute.xlu0 %351
    %v353 = vlaneseq
    %v354 = vshrl.u32 %v353, 7
    %v355 = vsub.s32 1, %v354
    %v356 = vrot.slane %v344, %v355
    %358 = vbcast.lane.b32.xlu0 %v356, 256
    %v359 = vpop.permute.xlu0 %358
    %v360 = vlaneseq
    %v361 = vshrl.u32 %v360, 7
    %v362 = vsub.s32 2, %v361
    %v363 = vrot.slane %v344, %v362
    %365 = vbcast.lane.b32.xlu0 %v363, 256
    %v366 = vpop.permute.xlu0 %365
    %v367 = vlaneseq
    %v368 = vshrl.u32 %v367, 7
    %v369 = vsub.s32 3, %v368
    %v370 = vrot.slane %v344, %v369
    %372 = vbcast.lane.b32.xlu0 %v370, 256
    %v373 = vpop.permute.xlu0 %372
    %v374 = vlaneseq
    %v375 = vshrl.u32 %v374, 7
    %v376 = vsub.s32 4, %v375
    %v377 = vrot.slane %v344, %v376
    %379 = vbcast.lane.b32.xlu0 %v377, 256
    %v380 = vpop.permute.xlu0 %379
    %v381 = vlaneseq
    %v382 = vshrl.u32 %v381, 7
    %v383 = vsub.s32 5, %v382
    %v384 = vrot.slane %v344, %v383
    %386 = vbcast.lane.b32.xlu0 %v384, 256
    %v387 = vpop.permute.xlu0 %386
    %v388 = vlaneseq
    %v389 = vshrl.u32 %v388, 7
    %v390 = vsub.s32 6, %v389
    %v391 = vrot.slane %v344, %v390
    %393 = vbcast.lane.b32.xlu0 %v391, 256
    %v394 = vpop.permute.xlu0 %393
    %v395 = vlaneseq
    %v396 = vshrl.u32 %v395, 7
    %v397 = vsub.s32 7, %v396
    %v398 = vrot.slane %v344, %v397
    %400 = vbcast.lane.b32.xlu0 %v398, 256
    %v401 = vpop.permute.xlu0 %400
    %v402 = vmul.f32 %v67, %v352
    %v403 = vmul.f32 %v68, %v359
    %v404 = vmul.f32 %v69, %v366
    %v405 = vmul.f32 %v70, %v373
    %v406 = vmul.f32 %v71, %v380
    %v407 = vmul.f32 %v72, %v387
    %v408 = vmul.f32 %v73, %v394
    %v409 = vmul.f32 %v74, %v401
    %v410 = vsel %vm86, %v402, 0.0
    %v411 = vrot.slane %v410, 4
    %v412 = vadd.f32 %v410, %v411
    %v413 = vrot.slane %v412, 2
    %v414 = vadd.f32 %v412, %v413
    %v415 = vrot.slane %v414, 1
    %v416 = vadd.f32 %v414, %v415
    %v417 = vsel %vm86, %v403, 0.0
    %v418 = vrot.slane %v417, 4
    %v419 = vadd.f32 %v417, %v418
    %v420 = vrot.slane %v419, 2
    %v421 = vadd.f32 %v419, %v420
    %v422 = vrot.slane %v421, 1
    %v423 = vadd.f32 %v421, %v422
    %v424 = vsel %vm86, %v404, 0.0
    %v425 = vrot.slane %v424, 4
    %v426 = vadd.f32 %v424, %v425
    %v427 = vrot.slane %v426, 2
    %v428 = vadd.f32 %v426, %v427
    %v429 = vrot.slane %v428, 1
    %v430 = vadd.f32 %v428, %v429
    %v431 = vsel %vm86, %v405, 0.0
    %v432 = vrot.slane %v431, 4
    %v433 = vadd.f32 %v431, %v432
    %v434 = vrot.slane %v433, 2
    %v435 = vadd.f32 %v433, %v434
    %v436 = vrot.slane %v435, 1
    %v437 = vadd.f32 %v435, %v436
    %v438 = vsel %vm86, %v406, 0.0
    %v439 = vrot.slane %v438, 4
    %v440 = vadd.f32 %v438, %v439
    %v441 = vrot.slane %v440, 2
    %v442 = vadd.f32 %v440, %v441
    %v443 = vrot.slane %v442, 1
    %v444 = vadd.f32 %v442, %v443
    %v445 = vsel %vm86, %v407, 0.0
    %v446 = vrot.slane %v445, 4
    %v447 = vadd.f32 %v445, %v446
    %v448 = vrot.slane %v447, 2
    %v449 = vadd.f32 %v447, %v448
    %v450 = vrot.slane %v449, 1
    %v451 = vadd.f32 %v449, %v450
    %v452 = vsel %vm86, %v408, 0.0
    %v453 = vrot.slane %v452, 4
    %v454 = vadd.f32 %v452, %v453
    %v455 = vrot.slane %v454, 2
    %v456 = vadd.f32 %v454, %v455
    %v457 = vrot.slane %v456, 1
    %v458 = vadd.f32 %v456, %v457
    %v459 = vsel %vm86, %v409, 0.0
    %v460 = vrot.slane %v459, 4
    %v461 = vadd.f32 %v459, %v460
    %v462 = vrot.slane %v461, 2
    %v463 = vadd.f32 %v461, %v462
    %v464 = vrot.slane %v463, 1
    %v465 = vadd.f32 %v463, %v464
    %v474 = vsel %vm317, %v423, %v416
    %v475 = vsel %vm319, %v430, %v474
    %v476 = vsel %vm321, %v437, %v475
    %v477 = vsel %vm323, %v444, %v476
    %v478 = vsel %vm325, %v451, %v477
    %v479 = vsel %vm327, %v458, %v478
    %v480 = vsel %vm329, %v465, %v479
    %482 = vst.msk [vmem:[#allocation9] sm:$0xff] %vm86, %v480
    // Predicated region
    $region38: #{tpu_custom_call.1} parent=1 // pred_check
      _
    $region39: #{tpu_custom_call.1} parent=1 // pred_check_branch
      %484 = sbr.rel (0) target = $region41
    $region40: #{tpu_custom_call.1} parent=1 // pred_region
      %s486 = ssub.s32 128, 128
      %487 = vsyncadd [#allocation5], %s486
      %s489 = sshll.u32 [#allocation9], 4
      %s490 = int_to_ptr.vmem [resolvable:$true] %s489
      %492 = dma.vmem_to_hbm [thread:$0]  %s490, 128, %s6, [#allocation5]
    $region41: #{tpu_custom_call.1} parent=1 // pred_fallthru
      _
    // Predicated region
    $region42: #{tpu_custom_call.1} parent=1 // pred_check
      _
    $region43: #{tpu_custom_call.1} parent=1 // pred_check_branch
      %494 = sbr.rel (0) target = $region45
    $region44: #{tpu_custom_call.1} parent=1 // pred_region
      %s496 = ssub.s32 128, 128
      %497 = vsyncadd [#allocation11], %s496
      %s499 = sshll.u32 [#allocation10], 4
      %s500 = int_to_ptr.vmem [resolvable:$true] %s499
      %502 = dma.vmem_to_hbm [thread:$0]  %s500, 128, %s7, [#allocation11]
    $region45: #{tpu_custom_call.1} parent=1 // pred_fallthru
      _
    // Predicated region
    $region46: #{tpu_custom_call.1} parent=1 // pred_check
      _
    $region47: #{tpu_custom_call.1} parent=1 // pred_check_branch
      %504 = sbr.rel (0) target = $region49
    $region48: #{tpu_custom_call.1} parent=1 // pred_region
      %505 = dma.done [#allocation5], 128
    $region49: #{tpu_custom_call.1} parent=1 // pred_fallthru
      _
    // Predicated region
    $region50: #{tpu_custom_call.1} parent=1 // pred_check
      _
    $region51: #{tpu_custom_call.1} parent=1 // pred_check_branch
      %507 = sbr.rel (0) target = $region53
    $region52: #{tpu_custom_call.1} parent=1 // pred_region
      %508 = dma.done [#allocation11], 128
    $region53: #{tpu_custom_call.1} parent=1 // pred_fallthru
      _
    %509 = vsyncpa [#allocation4], 1
    %510 = vsyncpa [#allocation7], 1
    %511 = vsyncpa [#allocation5], 1
    %512 = vsyncpa [#allocation11], 1

</llo_original>
